<compile_context>
chip_gen: v7x
topology: tpu7x:2x2x1
jax: 0.10.0
libtpu: 0.0.40
codegen_flags: <defaults>
</compile_context>

<pallas_src>
import math
from functools import partial

import jax
import jax.numpy as jnp
from jax.experimental import pallas as pl
from jax.experimental.pallas import tpu as pltpu


# ------------------------------ helpers -------------------------------------

def _round_up(x, m):
    return ((x + m - 1) // m) * m


def _row_tile(M, cap=512):
    """Largest multiple-of-8 tile <= cap that divides M (M already mult. of 8)."""
    t = min(cap, M)
    t -= t % 8
    while t >= 8:
        if M % t == 0:
            return t
        t -= 8
    return M


def _hid_tile(HID, cap=512):
    """Largest multiple-of-128 tile <= cap dividing HID, else the full HID."""
    t = min(cap, HID)
    t -= t % 128
    while t >= 128:
        if HID % t == 0:
            return t
        t -= 128
    return HID


_VMEM_LIMIT = 64 * 1024 * 1024


# --------------------------- fused Pallas kernels ----------------------------

def _attn_block_kernel(x_ref, bias_ref, wqkv_ref, bqkv_ref, wo_ref, bo_ref,
                       g_ref, beta_ref, o_ref, acc_ref, *, dh, eps):
    """grid=(B, H): one head per step; accumulate per-head output projection
    into f32 scratch; residual + LayerNorm1 at the last head."""
    h = pl.program_id(1)
    n_heads = pl.num_programs(1)

    @pl.when(h == 0)
    def _():
        acc_ref[...] = jnp.zeros_like(acc_ref)

    xb = x_ref[0].astype(jnp.bfloat16)                     # (S, D) bf16

    # fused Q/K/V projection for this head: (S, D) @ (D, 3*dh)
    z = jnp.dot(xb, wqkv_ref[0], preferred_element_type=jnp.float32) \
        + bqkv_ref[0]                                      # (S, 3*dh) f32
    q = z[:, :dh]                                          # scale pre-folded
    k = z[:, dh:2 * dh]
    v = z[:, 2 * dh:]

    # scores = q @ k^T  (+ additive mask bias), softmax in f32
    s = jax.lax.dot_general(
        q.astype(jnp.bfloat16), k.astype(jnp.bfloat16),
        (((1,), (1,)), ((), ())), preferred_element_type=jnp.float32)
    s = s + bias_ref[0]                                    # (S,S) + (1,S)
    m = jnp.max(s, axis=-1, keepdims=True)
    e = jnp.exp(s - m)
    p = e * pl.reciprocal(jnp.sum(e, axis=-1, keepdims=True), approx=True)

    ctx = jnp.dot(p.astype(jnp.bfloat16), v.astype(jnp.bfloat16),
                  preferred_element_type=jnp.float32)      # (S, dh)
    acc_ref[...] += jnp.dot(ctx.astype(jnp.bfloat16), wo_ref[0],
                            preferred_element_type=jnp.float32)  # (S, D)

    @pl.when(h == n_heads - 1)
    def _():
        y = acc_ref[...] + bo_ref[...] + x_ref[0].astype(jnp.float32)
        mu = jnp.mean(y, axis=-1, keepdims=True)
        yc = y - mu
        var = jnp.mean(yc * yc, axis=-1, keepdims=True)
        o_ref[0] = (yc * jax.lax.rsqrt(var + eps) * g_ref[...]
                    + beta_ref[...]).astype(o_ref.dtype)


def _gelu_f32(z):
    # TODO(synk): HF 'gelu' is exact erf-GELU; tanh approximation used because
    # erf has no guaranteed Mosaic lowering (~1e-3 deviation).
    c = math.sqrt(2.0 / math.pi)
    return 0.5 * z * (1.0 + jnp.tanh(c * (z + 0.044715 * z * z * z)))


def _ffn_core(h_ref, w1_ref, b1_ref, w2_ref, acc_ref):
    """One HID chunk: acc += gelu(h @ w1_chunk + b1_chunk) @ w2_chunk."""
    k = pl.program_id(1)

    @pl.when(k == 0)
    def _():
        acc_ref[...] = jnp.zeros_like(acc_ref)

    hb = h_ref[...].astype(jnp.bfloat16)                   # (tm, D)
    z = jnp.dot(hb, w1_ref[...], preferred_element_type=jnp.float32) + b1_ref[...]
    z = _gelu_f32(z)
    acc_ref[...] += jnp.dot(z.astype(jnp.bfloat16), w2_ref[...],
                            preferred_element_type=jnp.float32)   # (tm, D)


def _ffn_layernorm(h_ref, b2_ref, g_ref, beta_ref, acc_ref, eps):
    y = acc_ref[...] + b2_ref[...] + h_ref[...].astype(jnp.float32)
    mu = jnp.mean(y, axis=-1, keepdims=True)
    yc = y - mu
    var = jnp.mean(yc * yc, axis=-1, keepdims=True)
    return yc * jax.lax.rsqrt(var + eps) * g_ref[...] + beta_ref[...]


def _ffn_block_kernel(h_ref, w1_ref, b1_ref, w2_ref, b2_ref, g_ref, beta_ref,
                      o_ref, acc_ref, *, eps):
    """Row tile x HID tile: LN2(h + W2(gelu(W1 h + b1)) + b2)."""
    _ffn_core(h_ref, w1_ref, b1_ref, w2_ref, acc_ref)

    @pl.when(pl.program_id(1) == pl.num_programs(1) - 1)
    def _():
        o_ref[...] = _ffn_layernorm(h_ref, b2_ref, g_ref, beta_ref,
                                    acc_ref, eps).astype(o_ref.dtype)


def _ffn_cls_block_kernel(h_ref, w1_ref, b1_ref, w2_ref, b2_ref, g_ref,
                          beta_ref, wc_ref, bc_ref, o_ref, acc_ref, *, eps):
    """Last layer: FFN + residual + LN2, then classifier logits in the epilogue."""
    _ffn_core(h_ref, w1_ref, b1_ref, w2_ref, acc_ref)

    @pl.when(pl.program_id(1) == pl.num_programs(1) - 1)
    def _():
        ln = _ffn_layernorm(h_ref, b2_ref, g_ref, beta_ref, acc_ref, eps)
        o_ref[...] = (jnp.dot(ln.astype(jnp.bfloat16), wc_ref[...],
                              preferred_element_type=jnp.float32)
                      + bc_ref[...]).astype(o_ref.dtype)


# ------------------------------ wrappers -------------------------------------

def attention_block(x, attn_bias, lp, *, eps=1e-12):
    """x: (B,S,D) bf16, attn_bias: (B,1,S) f32 additive (0 keep / -1e30 mask)."""
    B, S, D = x.shape
    H, _, three_dh = lp["wqkv"].shape
    dh = three_dh // 3
    return pl.pallas_call(
        partial(_attn_block_kernel, dh=dh, eps=eps),
        out_shape=jax.ShapeDtypeStruct((B, S, D), jnp.bfloat16),
        grid=(B, H),
        in_specs=[
            pl.BlockSpec((1, S, D), lambda b, h: (b, 0, 0)),
            pl.BlockSpec((1, 1, S), lambda b, h: (b, 0, 0)),
            pl.BlockSpec((1, D, three_dh), lambda b, h: (h, 0, 0)),
            pl.BlockSpec((1, 1, three_dh), lambda b, h: (h, 0, 0)),
            pl.BlockSpec((1, dh, D), lambda b, h: (h, 0, 0)),
            pl.BlockSpec((1, D), lambda b, h: (0, 0)),
            pl.BlockSpec((1, D), lambda b, h: (0, 0)),
            pl.BlockSpec((1, D), lambda b, h: (0, 0)),
        ],
        out_specs=pl.BlockSpec((1, S, D), lambda b, h: (b, 0, 0)),
        scratch_shapes=[pltpu.VMEM((S, D), jnp.float32)],
        compiler_params=pltpu.CompilerParams(
            dimension_semantics=("parallel", "arbitrary"),
            vmem_limit_bytes=_VMEM_LIMIT),
    )(x, attn_bias, lp["wqkv"], lp["bqkv"], lp["wo"], lp["bo"],
      lp["ln1_g"], lp["ln1_b"])


def ffn_block(h, lp, *, eps=1e-12, classifier=None):
    """h: (M, D) bf16, M a multiple of 8.  Returns LN2 output (bf16) or, if
    `classifier=(wc, bc)` is given, lane-padded classifier logits (f32)."""
    M, D = h.shape
    HID = lp["w1"].shape[1]
    tm = _row_tile(M)
    tk = _hid_tile(HID)
    grid = (M // tm, HID // tk)

    in_specs = [
        pl.BlockSpec((tm, D), lambda i, k: (i, 0)),
        pl.BlockSpec((D, tk), lambda i, k: (0, k)),
        pl.BlockSpec((1, tk), lambda i, k: (0, k)),
        pl.BlockSpec((tk, D), lambda i, k: (k, 0)),
        pl.BlockSpec((1, D), lambda i, k: (0, 0)),
        pl.BlockSpec((1, D), lambda i, k: (0, 0)),
        pl.BlockSpec((1, D), lambda i, k: (0, 0)),
    ]
    if classifier is None:
        kern = partial(_ffn_block_kernel, eps=eps)
        out_shape = jax.ShapeDtypeStruct((M, D), jnp.bfloat16)
        out_spec = pl.BlockSpec((tm, D), lambda i, k: (i, 0))
        args = (h, lp["w1"], lp["b1"], lp["w2"], lp["b2"],
                lp["ln2_g"], lp["ln2_b"])
    else:
        wc, bc = classifier
        Cpad = wc.shape[1]
        kern = partial(_ffn_cls_block_kernel, eps=eps)
        out_shape = jax.ShapeDtypeStruct((M, Cpad), jnp.float32)
        out_spec = pl.BlockSpec((tm, Cpad), lambda i, k: (i, 0))
        in_specs += [
            pl.BlockSpec((D, Cpad), lambda i, k: (0, 0)),
            pl.BlockSpec((1, Cpad), lambda i, k: (0, 0)),
        ]
        args = (h, lp["w1"], lp["b1"], lp["w2"], lp["b2"],
                lp["ln2_g"], lp["ln2_b"], wc, bc)

    return pl.pallas_call(
        kern,
        out_shape=out_shape,
        grid=grid,
        in_specs=in_specs,
        out_specs=out_spec,
        scratch_shapes=[pltpu.VMEM((tm, D), jnp.float32)],
        compiler_params=pltpu.CompilerParams(
            dimension_semantics=("parallel", "arbitrary"),
            vmem_limit_bytes=_VMEM_LIMIT),
    )(*args)


# --------------------------- model (forward pass) ----------------------------

def init_params(key, dim, hidden_dim, n_layers, n_heads, num_classes):
    dh = dim // n_heads
    scale = 1.0 / math.sqrt(dh)   # folded into the Q weights/bias

    def dense(k, fan_in, fan_out):
        k1, k2 = jax.random.split(k)
        w = jax.random.normal(k1, (fan_in, fan_out), jnp.float32) * 0.02
        b = jax.random.normal(k2, (fan_out,), jnp.float32) * 0.02
        return w, b

    def heads_w(w):   # (D, D) -> (H, D, dh)
        return w.reshape(dim, n_heads, dh).transpose(1, 0, 2)

    def heads_b(b):   # (D,) -> (H, 1, dh)
        return b.reshape(n_heads, 1, dh)

    keys = jax.random.split(key, n_layers + 1)
    layers = []
    for lk in keys[:-1]:
        ks = jax.random.split(lk, 6)
        wq, bq = dense(ks[0], dim, dim)
        wk, bk = dense(ks[1], dim, dim)
        wv, bv = dense(ks[2], dim, dim)
        wo, bo = dense(ks[3], dim, dim)
        w1, b1 = dense(ks[4], dim, hidden_dim)
        w2, b2 = dense(ks[5], hidden_dim, dim)
        wqkv = jnp.concatenate(
            [heads_w(wq) * scale, heads_w(wk), heads_w(wv)], axis=-1)  # (H,D,3dh)
        bqkv = jnp.concatenate(
            [heads_b(bq) * scale, heads_b(bk), heads_b(bv)], axis=-1)  # (H,1,3dh)
        layers.append(dict(
            wqkv=wqkv.astype(jnp.bfloat16),
            bqkv=bqkv,                                                  # f32
            wo=wo.reshape(n_heads, dh, dim).astype(jnp.bfloat16),       # (H,dh,D)
            bo=bo.reshape(1, dim),
            w1=w1.astype(jnp.bfloat16), b1=b1.reshape(1, hidden_dim),
            w2=w2.astype(jnp.bfloat16), b2=b2.reshape(1, dim),
            ln1_g=jnp.ones((1, dim), jnp.float32),
            ln1_b=jnp.zeros((1, dim), jnp.float32),
            ln2_g=jnp.ones((1, dim), jnp.float32),
            ln2_b=jnp.zeros((1, dim), jnp.float32),
        ))
    wc, bc = dense(keys[-1], dim, num_classes)
    cpad = _round_up(num_classes, 128)          # lane-dense classifier output
    wc_pad = jnp.zeros((dim, cpad), jnp.float32).at[:, :num_classes].set(wc)
    bc_pad = jnp.zeros((1, cpad), jnp.float32).at[:, :num_classes].set(bc)
    return {"layers": layers,
            "wc": wc_pad.astype(jnp.bfloat16), "bc": bc_pad,
            "n_heads": n_heads, "num_classes": num_classes}


def transformer_forward(x, mask, params):
    """x: (B, S, D) f32, mask: (B, S) f32 (1=keep, 0=mask).

    Returns per-position logits (B, S, num_classes) [predict_sequence=True];
    squeezes the class axis if num_classes == 1 (matches the PyTorch module).
    """
    B, S, D = x.shape
    C = params["num_classes"]
    # additive attention bias: 0 where attended, -1e30 where masked
    attn_bias = ((mask - 1.0) * 1e30).astype(jnp.float32).reshape(B, 1, S)

    M = B * S
    Mp = _round_up(M, 8)
    n_layers = len(params["layers"])

    h = x.astype(jnp.bfloat16)                   # bf16 residual stream (HBM)
    logits = None
    for li, lp in enumerate(params["layers"]):
        h = attention_block(h, attn_bias, lp)                     # (B,S,D) bf16
        hf = h.reshape(M, D)
        if Mp != M:
            hf = jnp.pad(hf, ((0, Mp - M), (0, 0)))
        if li == n_layers - 1:
            logits = ffn_block(hf, lp, classifier=(params["wc"], params["bc"]))
            logits = logits[:M, :C].reshape(B, S, C)
        else:
            h = ffn_block(hf, lp)[:M].reshape(B, S, D)

    if C == 1:
        return logits[..., 0]
    return logits


# --------------------------------- driver ------------------------------------

if __name__ == "__main__":
    B, S, D = 2, 8, 32           # batch, sequence, embedding_dim
    HIDDEN, LAYERS, HEADS, C = 64, 2, 4, 3

    key = jax.random.PRNGKey(0)
    kx, kp = jax.random.split(key)
    x = jax.random.normal(kx, (B, S, D), jnp.float32)
    mask = jnp.ones((B, S), jnp.float32)
    mask = mask.at[1, S - 2:].set(0.0)   # mask out last two tokens of batch 1

    params = init_params(kp, D, HIDDEN, LAYERS, HEADS, C)

    out = transformer_forward(x, mask, params)
    out = jax.block_until_ready(out)
    assert out.shape == (B, S, C), out.shape
    assert bool(jnp.all(jnp.isfinite(out))), "non-finite output"
    print("KERNEL_OK")
</pallas_src>

<mosaic_0001>
module attributes {stable_mosaic.version = 11 : i64} {
  func.func @_attn_block_kernel(%arg0: i32, %arg1: i32, %arg2: memref<1x8x32xbf16, #tpu.memory_space<vmem>>, %arg3: memref<1x1x8xf32, #tpu.memory_space<vmem>>, %arg4: memref<1x32x24xbf16, #tpu.memory_space<vmem>>, %arg5: memref<1x1x24xf32, #tpu.memory_space<vmem>>, %arg6: memref<1x8x32xbf16, #tpu.memory_space<vmem>>, %arg7: memref<1x32xf32, #tpu.memory_space<vmem>>, %arg8: memref<1x32xf32, #tpu.memory_space<vmem>>, %arg9: memref<1x32xf32, #tpu.memory_space<vmem>>, %arg10: memref<1x8x32xbf16, #tpu.memory_space<vmem>>, %arg11: memref<8x32xf32, #tpu.memory_space<vmem>>) attributes {dimension_semantics = [#tpu.dimension_semantics<parallel>, #tpu.dimension_semantics<arbitrary>], iteration_bounds = array<i64: 2, 4>, scalar_prefetch = 0 : i64, scratch_operands = 1 : i64, tpu.core_type = #tpu.core_type<tc>, window_params = [{transform_indices = @transform_0, window_bounds = array<i64: 1, 8, 32>}, {transform_indices = @transform_1, window_bounds = array<i64: 1, 1, 8>}, {transform_indices = @transform_2, window_bounds = array<i64: 1, 32, 24>}, {transform_indices = @transform_3, window_bounds = array<i64: 1, 1, 24>}, {transform_indices = @transform_4, window_bounds = array<i64: 1, 8, 32>}, {pipeline_mode = #tpu.pipeline_mode<synchronous>, transform_indices = @transform_5, window_bounds = array<i64: 1, 32>}, {pipeline_mode = #tpu.pipeline_mode<synchronous>, transform_indices = @transform_6, window_bounds = array<i64: 1, 32>}, {pipeline_mode = #tpu.pipeline_mode<synchronous>, transform_indices = @transform_7, window_bounds = array<i64: 1, 32>}, {transform_indices = @transform_8, window_bounds = array<i64: 1, 8, 32>}]} {
    %c0_i32 = arith.constant 0 : i32
    %0 = arith.cmpi eq, %arg1, %c0_i32 : i32
    %1 = arith.extui %0 : i1 to i32
    %c0_i32_0 = arith.constant 0 : i32
    %2 = arith.cmpi ne, %1, %c0_i32_0 : i32
    scf.if %2 {
      %cst_25 = arith.constant 0.000000e+00 : f32
      %45 = vector.broadcast %cst_25 : f32 to vector<8x32xf32>
      %c0_26 = arith.constant 0 : index
      %c0_27 = arith.constant 0 : index
      %46 = vector.load %arg11[%c0_26, %c0_27] : memref<8x32xf32, #tpu.memory_space<vmem>>, vector<8x32xf32>
      tpu.vector_store %arg11[%c0_26, %c0_27], %45 {strides = array<i32>} : memref<8x32xf32, #tpu.memory_space<vmem>>, vector<8x32xf32>,
    } else {
    }
    %c0 = arith.constant 0 : index
    %c0_1 = arith.constant 0 : index
    %c0_2 = arith.constant 0 : index
    %3 = vector.load %arg2[%c0, %c0_1, %c0_2] : memref<1x8x32xbf16, #tpu.memory_space<vmem>>, vector<1x8x32xbf16>
    %4 = vector.shape_cast %3 : vector<1x8x32xbf16> to vector<8x32xbf16>
    %c0_3 = arith.constant 0 : index
    %c0_4 = arith.constant 0 : index
    %c0_5 = arith.constant 0 : index
    %5 = vector.load %arg4[%c0_3, %c0_4, %c0_5] : memref<1x32x24xbf16, #tpu.memory_space<vmem>>, vector<1x32x24xbf16>
    %6 = vector.shape_cast %5 : vector<1x32x24xbf16> to vector<32x24xbf16>
    %cst = arith.constant dense<0.000000e+00> : vector<8x24xf32>
    %7 = tpu.matmul %4, %6, %cst {dimension_numbers = #tpu.dot_dimension_numbers<[1], [0], [0], [1], [0, 0, 1, 1], [], []>} : vector<8x32xbf16>, vector<32x24xbf16>, vector<8x24xf32> -> vector<8x24xf32>
    %c0_6 = arith.constant 0 : index
    %c0_7 = arith.constant 0 : index
    %c0_8 = arith.constant 0 : index
    %8 = vector.load %arg5[%c0_6, %c0_7, %c0_8] : memref<1x1x24xf32, #tpu.memory_space<vmem>>, vector<1x1x24xf32>
    %9 = vector.shape_cast %8 : vector<1x1x24xf32> to vector<1x24xf32>
    %10 = vector.broadcast %9 : vector<1x24xf32> to vector<8x24xf32>
    %11 = arith.addf %7, %10 : vector<8x24xf32>
    %12 = vector.extract_strided_slice %11 {offsets = [0, 0], sizes = [8, 8], strides = [1, 1]} : vector<8x24xf32> to vector<8x8xf32>
    %13 = vector.extract_strided_slice %11 {offsets = [0, 8], sizes = [8, 8], strides = [1, 1]} : vector<8x24xf32> to vector<8x8xf32>
    %14 = vector.extract_strided_slice %11 {offsets = [0, 16], sizes = [8, 8], strides = [1, 1]} : vector<8x24xf32> to vector<8x8xf32>
    %15 = arith.truncf %12 : vector<8x8xf32> to vector<8x8xbf16>
    %16 = arith.truncf %13 : vector<8x8xf32> to vector<8x8xbf16>
    %cst_9 = arith.constant dense<0.000000e+00> : vector<8x8xf32>
    %17 = tpu.matmul %15, %16, %cst_9 {dimension_numbers = #tpu.dot_dimension_numbers<[1], [1], [0], [0], [0, 0, 1, 0], [], []>} : vector<8x8xbf16>, vector<8x8xbf16>, vector<8x8xf32> -> vector<8x8xf32>
    %c0_10 = arith.constant 0 : index
    %c0_11 = arith.constant 0 : index
    %c0_12 = arith.constant 0 : index
    %18 = vector.load %arg3[%c0_10, %c0_11, %c0_12] : memref<1x1x8xf32, #tpu.memory_space<vmem>>, vector<1x1x8xf32>
    %19 = vector.shape_cast %18 : vector<1x1x8xf32> to vector<1x8xf32>
    %20 = vector.broadcast %19 : vector<1x8xf32> to vector<8x8xf32>
    %21 = arith.addf %17, %20 : vector<8x8xf32>
    %cst_13 = arith.constant dense<0xFF800000> : vector<8xf32>
    %22 = vector.multi_reduction <maximumf>, %21, %cst_13 [1] : vector<8x8xf32> to vector<8xf32>
    %23 = vector.shape_cast %22 : vector<8xf32> to vector<8x1xf32>
    %24 = vector.broadcast %23 : vector<8x1xf32> to vector<8x8xf32>
    %25 = arith.subf %21, %24 : vector<8x8xf32>
    %26 = math.exp %25 : vector<8x8xf32>
    %cst_14 = arith.constant dense<0.000000e+00> : vector<8xf32>
    %27 = vector.multi_reduction <add>, %26, %cst_14 [1] : vector<8x8xf32> to vector<8xf32>
    %28 = vector.shape_cast %27 : vector<8xf32> to vector<8x1xf32>
    %29 = tpu.reciprocal %28 {approx = true} : vector<8x1xf32> -> vector<8x1xf32>
    %30 = vector.broadcast %29 : vector<8x1xf32> to vector<8x8xf32>
    %31 = arith.mulf %26, %30 : vector<8x8xf32>
    %32 = arith.truncf %31 : vector<8x8xf32> to vector<8x8xbf16>
    %33 = arith.truncf %14 : vector<8x8xf32> to vector<8x8xbf16>
    %cst_15 = arith.constant dense<0.000000e+00> : vector<8x8xf32>
    %34 = tpu.matmul %32, %33, %cst_15 {dimension_numbers = #tpu.dot_dimension_numbers<[1], [0], [0], [1], [0, 0, 1, 1], [], []>} : vector<8x8xbf16>, vector<8x8xbf16>, vector<8x8xf32> -> vector<8x8xf32>
    %c0_16 = arith.constant 0 : index
    %c0_17 = arith.constant 0 : index
    %35 = vector.load %arg11[%c0_16, %c0_17] : memref<8x32xf32, #tpu.memory_space<vmem>>, vector<8x32xf32>
    %36 = arith.truncf %34 : vector<8x8xf32> to vector<8x8xbf16>
    %c0_18 = arith.constant 0 : index
    %c0_19 = arith.constant 0 : index
    %c0_20 = arith.constant 0 : index
    %37 = vector.load %arg6[%c0_18, %c0_19, %c0_20] : memref<1x8x32xbf16, #tpu.memory_space<vmem>>, vector<1x8x32xbf16>
    %38 = vector.shape_cast %37 : vector<1x8x32xbf16> to vector<8x32xbf16>
    %cst_21 = arith.constant dense<0.000000e+00> : vector<8x32xf32>
    %39 = tpu.matmul %36, %38, %cst_21 {dimension_numbers = #tpu.dot_dimension_numbers<[1], [0], [0], [1], [0, 0, 1, 1], [], []>} : vector<8x8xbf16>, vector<8x32xbf16>, vector<8x32xf32> -> vector<8x32xf32>
    %40 = arith.addf %35, %39 : vector<8x32xf32>
    %c0_22 = arith.constant 0 : index
    %c0_23 = arith.constant 0 : index
    %41 = vector.load %arg11[%c0_22, %c0_23] : memref<8x32xf32, #tpu.memory_space<vmem>>, vector<8x32xf32>
    tpu.vector_store %arg11[%c0_22, %c0_23], %40 {strides = array<i32>} : memref<8x32xf32, #tpu.memory_space<vmem>>, vector<8x32xf32>,
    %c3_i32 = arith.constant 3 : i32
    %42 = arith.cmpi eq, %arg1, %c3_i32 : i32
    %43 = arith.extui %42 : i1 to i32
    %c0_i32_24 = arith.constant 0 : i32
    %44 = arith.cmpi ne, %43, %c0_i32_24 : i32
    scf.if %44 {
      %c0_25 = arith.constant 0 : index
      %c0_26 = arith.constant 0 : index
      %45 = vector.load %arg11[%c0_25, %c0_26] : memref<8x32xf32, #tpu.memory_space<vmem>>, vector<8x32xf32>
      %c0_27 = arith.constant 0 : index
      %c0_28 = arith.constant 0 : index
      %46 = vector.load %arg7[%c0_27, %c0_28] : memref<1x32xf32, #tpu.memory_space<vmem>>, vector<1x32xf32>
      %47 = vector.broadcast %46 : vector<1x32xf32> to vector<8x32xf32>
      %48 = arith.addf %45, %47 : vector<8x32xf32>
      %c0_29 = arith.constant 0 : index
      %c0_30 = arith.constant 0 : index
      %c0_31 = arith.constant 0 : index
      %49 = vector.load %arg2[%c0_29, %c0_30, %c0_31] : memref<1x8x32xbf16, #tpu.memory_space<vmem>>, vector<1x8x32xbf16>
      %50 = vector.shape_cast %49 : vector<1x8x32xbf16> to vector<8x32xbf16>
      %51 = arith.extf %50 : vector<8x32xbf16> to vector<8x32xf32>
      %52 = arith.addf %48, %51 : vector<8x32xf32>
      %cst_32 = arith.constant dense<0.000000e+00> : vector<8xf32>
      %53 = vector.multi_reduction <add>, %52, %cst_32 [1] : vector<8x32xf32> to vector<8xf32>
      %54 = vector.shape_cast %53 : vector<8xf32> to vector<8x1xf32>
      %cst_33 = arith.constant 3.200000e+01 : f32
      %55 = vector.broadcast %cst_33 : f32 to vector<8x1xf32>
      %56 = arith.divf %54, %55 : vector<8x1xf32>
      %57 = vector.broadcast %56 : vector<8x1xf32> to vector<8x32xf32>
      %58 = arith.subf %52, %57 : vector<8x32xf32>
      %59 = arith.mulf %58, %58 : vector<8x32xf32>
      %cst_34 = arith.constant dense<0.000000e+00> : vector<8xf32>
      %60 = vector.multi_reduction <add>, %59, %cst_34 [1] : vector<8x32xf32> to vector<8xf32>
      %61 = vector.shape_cast %60 : vector<8xf32> to vector<8x1xf32>
      %cst_35 = arith.constant 3.200000e+01 : f32
      %62 = vector.broadcast %cst_35 : f32 to vector<8x1xf32>
      %63 = arith.divf %61, %62 : vector<8x1xf32>
      %cst_36 = arith.constant 9.99999996E-13 : f32
      %64 = vector.broadcast %cst_36 : f32 to vector<8x1xf32>
      %65 = arith.addf %63, %64 : vector<8x1xf32>
      %66 = math.rsqrt %65 : vector<8x1xf32>
      %67 = vector.broadcast %66 : vector<8x1xf32> to vector<8x32xf32>
      %68 = arith.mulf %58, %67 : vector<8x32xf32>
      %c0_37 = arith.constant 0 : index
      %c0_38 = arith.constant 0 : index
      %69 = vector.load %arg8[%c0_37, %c0_38] : memref<1x32xf32, #tpu.memory_space<vmem>>, vector<1x32xf32>
      %70 = vector.broadcast %69 : vector<1x32xf32> to vector<8x32xf32>
      %71 = arith.mulf %68, %70 : vector<8x32xf32>
      %c0_39 = arith.constant 0 : index
      %c0_40 = arith.constant 0 : index
      %72 = vector.load %arg9[%c0_39, %c0_40] : memref<1x32xf32, #tpu.memory_space<vmem>>, vector<1x32xf32>
      %73 = vector.broadcast %72 : vector<1x32xf32> to vector<8x32xf32>
      %74 = arith.addf %71, %73 : vector<8x32xf32>
      %75 = arith.truncf %74 : vector<8x32xf32> to vector<8x32xbf16>
      %c0_41 = arith.constant 0 : index
      %c0_42 = arith.constant 0 : index
      %c0_43 = arith.constant 0 : index
      %76 = vector.load %arg10[%c0_41, %c0_42, %c0_43] : memref<1x8x32xbf16, #tpu.memory_space<vmem>>, vector<1x8x32xbf16>
      %77 = vector.shape_cast %76 : vector<1x8x32xbf16> to vector<8x32xbf16>
      %78 = vector.shape_cast %75 : vector<8x32xbf16> to vector<1x8x32xbf16>
      tpu.vector_store %arg10[%c0_41, %c0_42, %c0_43], %78 {strides = array<i32>} : memref<1x8x32xbf16, #tpu.memory_space<vmem>>, vector<1x8x32xbf16>,
    } else {
    }
    return
  }
  func.func @transform_0(%arg0: i32, %arg1: i32) -> (i32, i32, i32) {
    %c0_i32 = arith.constant 0 : i32
    %c0_i32_0 = arith.constant 0 : i32
    %c0_i32_1 = arith.constant 0 : i32
    return %arg0, %c0_i32, %c0_i32_0 : i32, i32, i32
  }
  func.func @transform_1(%arg0: i32, %arg1: i32) -> (i32, i32, i32) {
    %c0_i32 = arith.constant 0 : i32
    %c0_i32_0 = arith.constant 0 : i32
    %c0_i32_1 = arith.constant 0 : i32
    return %arg0, %c0_i32, %c0_i32_0 : i32, i32, i32
  }
  func.func @transform_2(%arg0: i32, %arg1: i32) -> (i32, i32, i32) {
    %c0_i32 = arith.constant 0 : i32
    %c0_i32_0 = arith.constant 0 : i32
    %c0_i32_1 = arith.constant 0 : i32
    return %arg1, %c0_i32, %c0_i32_0 : i32, i32, i32
  }
  func.func @transform_3(%arg0: i32, %arg1: i32) -> (i32, i32, i32) {
    %c0_i32 = arith.constant 0 : i32
    %c0_i32_0 = arith.constant 0 : i32
    %c0_i32_1 = arith.constant 0 : i32
    return %arg1, %c0_i32, %c0_i32_0 : i32, i32, i32
  }
  func.func @transform_4(%arg0: i32, %arg1: i32) -> (i32, i32, i32) {
    %c0_i32 = arith.constant 0 : i32
    %c0_i32_0 = arith.constant 0 : i32
    %c0_i32_1 = arith.constant 0 : i32
    return %arg1, %c0_i32, %c0_i32_0 : i32, i32, i32
  }
  func.func @transform_5(%arg0: i32, %arg1: i32) -> (i32, i32) {
    %c0_i32 = arith.constant 0 : i32
    %c0_i32_0 = arith.constant 0 : i32
    %c0_i32_1 = arith.constant 0 : i32
    return %c0_i32, %c0_i32_0 : i32, i32
  }
  func.func @transform_6(%arg0: i32, %arg1: i32) -> (i32, i32) {
    %c0_i32 = arith.constant 0 : i32
    %c0_i32_0 = arith.constant 0 : i32
    %c0_i32_1 = arith.constant 0 : i32
    return %c0_i32, %c0_i32_0 : i32, i32
  }
  func.func @transform_7(%arg0: i32, %arg1: i32) -> (i32, i32) {
    %c0_i32 = arith.constant 0 : i32
    %c0_i32_0 = arith.constant 0 : i32
    %c0_i32_1 = arith.constant 0 : i32
    return %c0_i32, %c0_i32_0 : i32, i32
  }
  func.func @transform_8(%arg0: i32, %arg1: i32) -> (i32, i32, i32) {
    %c0_i32 = arith.constant 0 : i32
    %c0_i32_0 = arith.constant 0 : i32
    %c0_i32_1 = arith.constant 0 : i32
    return %arg0, %c0_i32, %c0_i32_0 : i32, i32, i32
  }
}

</mosaic_0001>

<llo_original>
// kernel: tpu_custom_call.1
$region0: #{tpu_custom_call.1}
  #allocation0 [shape = 'u32[]', space=smem, size = 0x4, offset = 0x4, fixed_abs, tag = 'smem constant byte address 0x4 - core index']
  #allocation1 [shape = 'u32[144,128]{1,0:T(1,128)}', space=vmem, size = 0x12000, scoped, tag = 'internal scratch']
  #allocation2 [shape = 'f32[8,32]{1,0:T(8,128)}', space=vmem, size = 0x1000, scoped, tag = 'scratch operand']
  %s0 = inlined_call_operand.hbm [shape: bf16[2,8,32], index: 0, kind: input, shape index: {}]
  %s1 = inlined_call_operand.hbm [shape: f32[2,1,8], index: 1, kind: input, shape index: {}]
  %s2 = inlined_call_operand.hbm [shape: bf16[4,32,24], index: 2, kind: input, shape index: {}]
  %s3 = inlined_call_operand.hbm [shape: f32[4,1,24], index: 3, kind: input, shape index: {}]
  %s4 = inlined_call_operand.hbm [shape: bf16[4,8,32], index: 4, kind: input, shape index: {}]
  %s5 = inlined_call_operand.hbm [shape: f32[1,32], index: 5, kind: input, shape index: {}]
  %s6 = inlined_call_operand.hbm [shape: f32[1,32], index: 6, kind: input, shape index: {}]
  %s7 = inlined_call_operand.hbm [shape: f32[1,32], index: 7, kind: input, shape index: {}]
  %s8 = inlined_call_operand.hbm [shape: bf16[2,8,32], index: 8, kind: output, shape index: {}]
  %s9 = sld [smem:[#allocation0]]
  $region105: #{tpu_custom_call.1} parent=0
    _
  %s11 = ssub.s32 1, %s9
  %s12 = scalar_select 0, %s11, %s9
  $region1: #{tpu_custom_call.1} parent=0
    #allocation3 [shape = 'u8[4096]{0}', space=vmem, size = 0x1000, scoped, tag = 'input window, operand 0']
    #allocation4 [shape = 's32[2]{0}', space=sflag, size = 0x8, scoped, tag = 'scoped memory for tpu_custom_call.1']
    #allocation5 [shape = 's32[2]{0}', space=sflag, size = 0x8, scoped, tag = 'scoped memory for tpu_custom_call.1']
    #allocation6 [shape = 'u8[1024]{0}', space=vmem, size = 0x400, scoped, tag = 'input window, operand 1']
    #allocation7 [shape = 's32[2]{0}', space=sflag, size = 0x8, scoped, tag = 'scoped memory for tpu_custom_call.1']
    #allocation8 [shape = 'u8[16384]{0}', space=vmem, size = 0x4000, scoped, tag = 'input window, operand 2']
    #allocation9 [shape = 'u8[1024]{0}', space=vmem, size = 0x400, scoped, tag = 'input window, operand 3']
    #allocation10 [shape = 's32[2]{0}', space=sflag, size = 0x8, scoped, tag = 'scoped memory for tpu_custom_call.1']
    #allocation11 [shape = 'u8[4096]{0}', space=vmem, size = 0x1000, scoped, tag = 'input window, operand 4']
    #allocation12 [shape = 'u8[512]{0}', space=vmem, size = 0x400, scoped, tag = 'input window, operand 5, single buffered']
    #allocation13 [shape = 's32[1]{0}', space=sflag, size = 0x4, scoped, tag = 'scoped memory for tpu_custom_call.1']
    #allocation14 [shape = 'u8[512]{0}', space=vmem, size = 0x400, scoped, tag = 'input window, operand 6, single buffered']
    #allocation15 [shape = 'u8[512]{0}', space=vmem, size = 0x400, scoped, tag = 'input window, operand 7, single buffered']
    #allocation16 [shape = 's32[1]{0}', space=sflag, size = 0x4, scoped, tag = 'scoped memory for tpu_custom_call.1']
    #allocation17 [shape = 'u8[4096]{0}', space=vmem, size = 0x1000, scoped, tag = 'output window, operand 0']
    %13 = vsyncpa [#allocation4], 0
    %s14 = scalar_lea.sflag [#allocation4], 1
    %15 = vsyncpa %s14, 0
    %16 = vsyncpa [#allocation7], 0
    %s17 = scalar_lea.sflag [#allocation7], 1
    %18 = vsyncpa %s17, 0
    %19 = vsyncpa [#allocation10], 0
    %s20 = scalar_lea.sflag [#allocation10], 1
    %21 = vsyncpa %s20, 0
    %22 = vsyncpa [#allocation13], 0
    %23 = vsyncpa [#allocation16], 0
    %24 = vsyncpa [#allocation5], 0
    %s25 = scalar_lea.sflag [#allocation5], 1
    %26 = vsyncpa %s25, 0
    loop: start=0, step=1, limit=10
    $region2: #{tpu_custom_call.1} parent=1 // loop_pre_header
      _
    $region3: #{tpu_custom_call.1} parent=1 // loop_header
      %s28 = sphi 0, %s32
      %p29 = scmp.ge.s32.totalorder %s28, 10
      %s35 = sphi 0, %s47
      %s36 = sphi 0, %s43
      %s37 = sphi 0, %s35
      %s38 = sphi 0, %s36
      %s39 = sphi 0, %s37
      %s40 = sphi 0, %s38
      %s50 = sphi 0, %s52
      %s53 = sphi 0, %s50
      %s54 = sphi 0, %s53
      %s70 = sphi 0, %s54
      %s76 = sphi 0, %s78
      %s79 = sphi 0, %s76
      %s80 = sphi 0, %s79
      %s96 = sphi 0, %s80
      %s102 = sphi 0, %s104
      %s105 = sphi 0, %s102
      %s106 = sphi 0, %s105
      %s122 = sphi 0, %s106
      %s128 = sphi 0, %s130
      %s131 = sphi 0, %s128
      %s132 = sphi 0, %s131
      %s148 = sphi 0, %s132
      %s154 = sphi 0, %s156
      %s157 = sphi 0, %s154
      %s158 = sphi 0, %s157
      %s174 = sphi 0, %s158
      %s178 = sphi 0, %s178
      %s180 = sphi 0, %s178
      %s181 = sphi 0, %s180
      %s195 = sphi 0, %s181
      %s199 = sphi 0, %s199
      %s201 = sphi 0, %s199
      %s202 = sphi 0, %s201
      %s216 = sphi 0, %s202
      %s220 = sphi 0, %s220
      %s222 = sphi 0, %s220
      %s223 = sphi 0, %s222
      %s237 = sphi 0, %s223
      %s243 = sphi 0, %s245
      %s246 = sphi 0, %s243
      %s247 = sphi 0, %s246
      %s263 = sphi 0, %s247
    $region4: #{tpu_custom_call.1} parent=1 // loop_header_branch
      %31 = sbr.rel (%p29) target = $region8
    $region5: #{tpu_custom_call.1} parent=1 // loop_body
      %s33 = ssub.s32 %s28, 1
      %s34 = ssub.s32 %s28, 2
      %s41 = sadd.s32 1, %s36
      %p42 = scmp.ge.s32.totalorder %s41, 4
      %s43 = scalar_select %p42, 0, %s41
      %s44 = sadd.s32 1, %s35
      %s45 = scalar_select %p42, %s44, %s35
      %p46 = scmp.ge.s32.totalorder %s45, 2
      %s47 = scalar_select %p46, 0, %s45
      %s48 = ssub.s32 %s35, %s47
      %p49 = scmp.eq.s32.totalorder %s48, 0
      %s51 = sadd.s32 %s50, 1
      %s52 = scalar_select %p49, %s50, %s51
      %p55 = pneg %p49
      %p56 = scmp.eq.s32.totalorder %s28, 7
      %p57 = por %p55, %p56
      %p58 = scmp.ne.s32.totalorder %s50, %s53
      %p59 = scmp.eq.s32.totalorder %s28, 0
      %p60 = por %p58, %p59
      %p61 = scmp.ne.s32.totalorder %s50, %s53
      %p62 = scmp.eq.s32.totalorder %s33, 7
      %p63 = por %p61, %p62
      %p64 = scmp.ne.s32.totalorder %s53, %s54
      %p65 = scmp.eq.s32.totalorder %s33, 0
      %p66 = por %p64, %p65
      %p67 = scmp.ne.s32.totalorder %s53, %s54
      %p68 = scmp.eq.s32.totalorder %s34, 7
      %p69 = por %p67, %p68
      %p71 = scmp.ne.s32.totalorder %s54, %s70
      %p72 = scmp.eq.s32.totalorder %s34, 0
      %p73 = por %p71, %p72
      %s74 = ssub.s32 %s35, %s47
      %p75 = scmp.eq.s32.totalorder %s74, 0
      %s77 = sadd.s32 %s76, 1
      %s78 = scalar_select %p75, %s76, %s77
      %p81 = pneg %p75
      %p82 = scmp.eq.s32.totalorder %s28, 7
      %p83 = por %p81, %p82
      %p84 = scmp.ne.s32.totalorder %s76, %s79
      %p85 = scmp.eq.s32.totalorder %s28, 0
      %p86 = por %p84, %p85
      %p87 = scmp.ne.s32.totalorder %s76, %s79
      %p88 = scmp.eq.s32.totalorder %s33, 7
      %p89 = por %p87, %p88
      %p90 = scmp.ne.s32.totalorder %s79, %s80
      %p91 = scmp.eq.s32.totalorder %s33, 0
      %p92 = por %p90, %p91
      %p93 = scmp.ne.s32.totalorder %s79, %s80
      %p94 = scmp.eq.s32.totalorder %s34, 7
      %p95 = por %p93, %p94
      %p97 = scmp.ne.s32.totalorder %s80, %s96
      %p98 = scmp.eq.s32.totalorder %s34, 0
      %p99 = por %p97, %p98
      %s100 = ssub.s32 %s36, %s43
      %p101 = scmp.eq.s32.totalorder %s100, 0
      %s103 = sadd.s32 %s102, 1
      %s104 = scalar_select %p101, %s102, %s103
      %p107 = pneg %p101
      %p108 = scmp.eq.s32.totalorder %s28, 7
      %p109 = por %p107, %p108
      %p110 = scmp.ne.s32.totalorder %s102, %s105
      %p111 = scmp.eq.s32.totalorder %s28, 0
      %p112 = por %p110, %p111
      %p113 = scmp.ne.s32.totalorder %s102, %s105
      %p114 = scmp.eq.s32.totalorder %s33, 7
      %p115 = por %p113, %p114
      %p116 = scmp.ne.s32.totalorder %s105, %s106
      %p117 = scmp.eq.s32.totalorder %s33, 0
      %p118 = por %p116, %p117
      %p119 = scmp.ne.s32.totalorder %s105, %s106
      %p120 = scmp.eq.s32.totalorder %s34, 7
      %p121 = por %p119, %p120
      %p123 = scmp.ne.s32.totalorder %s106, %s122
      %p124 = scmp.eq.s32.totalorder %s34, 0
      %p125 = por %p123, %p124
      %s126 = ssub.s32 %s36, %s43
      %p127 = scmp.eq.s32.totalorder %s126, 0
      %s129 = sadd.s32 %s128, 1
      %s130 = scalar_select %p127, %s128, %s129
      %p133 = pneg %p127
      %p134 = scmp.eq.s32.totalorder %s28, 7
      %p135 = por %p133, %p134
      %p136 = scmp.ne.s32.totalorder %s128, %s131
      %p137 = scmp.eq.s32.totalorder %s28, 0
      %p138 = por %p136, %p137
      %p139 = scmp.ne.s32.totalorder %s128, %s131
      %p140 = scmp.eq.s32.totalorder %s33, 7
      %p141 = por %p139, %p140
      %p142 = scmp.ne.s32.totalorder %s131, %s132
      %p143 = scmp.eq.s32.totalorder %s33, 0
      %p144 = por %p142, %p143
      %p145 = scmp.ne.s32.totalorder %s131, %s132
      %p146 = scmp.eq.s32.totalorder %s34, 7
      %p147 = por %p145, %p146
      %p149 = scmp.ne.s32.totalorder %s132, %s148
      %p150 = scmp.eq.s32.totalorder %s34, 0
      %p151 = por %p149, %p150
      %s152 = ssub.s32 %s36, %s43
      %p153 = scmp.eq.s32.totalorder %s152, 0
      %s155 = sadd.s32 %s154, 1
      %s156 = scalar_select %p153, %s154, %s155
      %p159 = pneg %p153
      %p160 = scmp.eq.s32.totalorder %s28, 7
      %p161 = por %p159, %p160
      %p162 = scmp.ne.s32.totalorder %s154, %s157
      %p163 = scmp.eq.s32.totalorder %s28, 0
      %p164 = por %p162, %p163
      %p165 = scmp.ne.s32.totalorder %s154, %s157
      %p166 = scmp.eq.s32.totalorder %s33, 7
      %p167 = por %p165, %p166
      %p168 = scmp.ne.s32.totalorder %s157, %s158
      %p169 = scmp.eq.s32.totalorder %s33, 0
      %p170 = por %p168, %p169
      %p171 = scmp.ne.s32.totalorder %s157, %s158
      %p172 = scmp.eq.s32.totalorder %s34, 7
      %p173 = por %p171, %p172
      %p175 = scmp.ne.s32.totalorder %s158, %s174
      %p176 = scmp.eq.s32.totalorder %s34, 0
      %p177 = por %p175, %p176
      %s179 = sadd.s32 %s178, 1
      %p182 = scmp.eq.s32.totalorder %s28, 7
      %p183 = scmp.ne.s32.totalorder %s178, %s180
      %p184 = scmp.eq.s32.totalorder %s28, 0
      %p185 = por %p183, %p184
      %p186 = scmp.ne.s32.totalorder %s178, %s180
      %p187 = scmp.eq.s32.totalorder %s33, 7
      %p188 = por %p186, %p187
      %p189 = scmp.ne.s32.totalorder %s180, %s181
      %p190 = scmp.eq.s32.totalorder %s33, 0
      %p191 = por %p189, %p190
      %p192 = scmp.ne.s32.totalorder %s180, %s181
      %p193 = scmp.eq.s32.totalorder %s34, 7
      %p194 = por %p192, %p193
      %p196 = scmp.ne.s32.totalorder %s181, %s195
      %p197 = scmp.eq.s32.totalorder %s34, 0
      %p198 = por %p196, %p197
      %s200 = sadd.s32 %s199, 1
      %p203 = scmp.eq.s32.totalorder %s28, 7
      %p204 = scmp.ne.s32.totalorder %s199, %s201
      %p205 = scmp.eq.s32.totalorder %s28, 0
      %p206 = por %p204, %p205
      %p207 = scmp.ne.s32.totalorder %s199, %s201
      %p208 = scmp.eq.s32.totalorder %s33, 7
      %p209 = por %p207, %p208
      %p210 = scmp.ne.s32.totalorder %s201, %s202
      %p211 = scmp.eq.s32.totalorder %s33, 0
      %p212 = por %p210, %p211
      %p213 = scmp.ne.s32.totalorder %s201, %s202
      %p214 = scmp.eq.s32.totalorder %s34, 7
      %p215 = por %p213, %p214
      %p217 = scmp.ne.s32.totalorder %s202, %s216
      %p218 = scmp.eq.s32.totalorder %s34, 0
      %p219 = por %p217, %p218
      %s221 = sadd.s32 %s220, 1
      %p224 = scmp.eq.s32.totalorder %s28, 7
      %p225 = scmp.ne.s32.totalorder %s220, %s222
      %p226 = scmp.eq.s32.totalorder %s28, 0
      %p227 = por %p225, %p226
      %p228 = scmp.ne.s32.totalorder %s220, %s222
      %p229 = scmp.eq.s32.totalorder %s33, 7
      %p230 = por %p228, %p229
      %p231 = scmp.ne.s32.totalorder %s222, %s223
      %p232 = scmp.eq.s32.totalorder %s33, 0
      %p233 = por %p231, %p232
      %p234 = scmp.ne.s32.totalorder %s222, %s223
      %p235 = scmp.eq.s32.totalorder %s34, 7
      %p236 = por %p234, %p235
      %p238 = scmp.ne.s32.totalorder %s223, %s237
      %p239 = scmp.eq.s32.totalorder %s34, 0
      %p240 = por %p238, %p239
      %s241 = ssub.s32 %s35, %s47
      %p242 = scmp.eq.s32.totalorder %s241, 0
      %s244 = sadd.s32 %s243, 1
      %s245 = scalar_select %p242, %s243, %s244
      %p248 = pneg %p242
      %p249 = scmp.eq.s32.totalorder %s28, 7
      %p250 = por %p248, %p249
      %p251 = scmp.ne.s32.totalorder %s243, %s246
      %p252 = scmp.eq.s32.totalorder %s28, 0
      %p253 = por %p251, %p252
      %p254 = scmp.ne.s32.totalorder %s243, %s246
      %p255 = scmp.eq.s32.totalorder %s33, 7
      %p256 = por %p254, %p255
      %p257 = scmp.ne.s32.totalorder %s246, %s247
      %p258 = scmp.eq.s32.totalorder %s33, 0
      %p259 = por %p257, %p258
      %p260 = scmp.ne.s32.totalorder %s246, %s247
      %p261 = scmp.eq.s32.totalorder %s34, 7
      %p262 = por %p260, %p261
      %p264 = scmp.ne.s32.totalorder %s247, %s263
      %p265 = scmp.eq.s32.totalorder %s34, 0
      %p266 = por %p264, %p265
      %p267 = scmp.le.s32.totalorder 1, %s28
      %p268 = scmp.lt.s32.totalorder %s28, 9
      %p269 = pnand %p267, %p268
      %p270 = pneg %p269
      // Predicated region
      $region9: #{tpu_custom_call.1} parent=5 // pred_check
        _
      $region10: #{tpu_custom_call.1} parent=5 // pred_check_branch
        %272 = sbr.rel (%p269) target = $region12
      $region11: #{tpu_custom_call.1} parent=5 // pred_region
        %s273 = ssub.s32 %s28, 1
        // Predicated region
        $region13: #{tpu_custom_call.1} parent=11 // pred_check
          %p274 = pneg %p191
        $region14: #{tpu_custom_call.1} parent=11 // pred_check_branch
          %276 = sbr.rel (%p274) target = $region16
        $region15: #{tpu_custom_call.1} parent=11 // pred_region
          %s278 = ssub.s32 16, 16
          %279 = vsyncadd [#allocation13], %s278
          %s281 = sshll.u32 [#allocation12], 4
          %s282 = int_to_ptr.vmem [resolvable:$true] %s281
          %284 = dma.hbm_to_vmem [thread:$0]  %s5, 16, %s282, [#allocation13]
        $region16: #{tpu_custom_call.1} parent=11 // pred_fallthru
          _
        // Predicated region
        $region17: #{tpu_custom_call.1} parent=11 // pred_check
          %p285 = pneg %p212
        $region18: #{tpu_custom_call.1} parent=11 // pred_check_branch
          %287 = sbr.rel (%p285) target = $region20
        $region19: #{tpu_custom_call.1} parent=11 // pred_region
          %s289 = ssub.s32 16, 16
          %290 = vsyncadd [#allocation13], %s289
          %s292 = sshll.u32 [#allocation14], 4
          %s293 = int_to_ptr.vmem [resolvable:$true] %s292
          %295 = dma.hbm_to_vmem [thread:$0]  %s6, 16, %s293, [#allocation13]
        $region20: #{tpu_custom_call.1} parent=11 // pred_fallthru
          _
        // Predicated region
        $region21: #{tpu_custom_call.1} parent=11 // pred_check
          %p296 = pneg %p233
        $region22: #{tpu_custom_call.1} parent=11 // pred_check_branch
          %298 = sbr.rel (%p296) target = $region24
        $region23: #{tpu_custom_call.1} parent=11 // pred_region
          %s300 = ssub.s32 16, 16
          %301 = vsyncadd [#allocation16], %s300
          %s303 = sshll.u32 [#allocation15], 4
          %s304 = int_to_ptr.vmem [resolvable:$true] %s303
          %306 = dma.hbm_to_vmem [thread:$0]  %s7, 16, %s304, [#allocation16]
        $region24: #{tpu_custom_call.1} parent=11 // pred_fallthru
          _
      $region12: #{tpu_custom_call.1} parent=5 // pred_fallthru
        _
      %p307 = scmp.lt.s32.totalorder %s28, 8
      // Predicated region
      $region25: #{tpu_custom_call.1} parent=5 // pred_check
        %p308 = pneg %p307
      $region26: #{tpu_custom_call.1} parent=5 // pred_check_branch
        %310 = sbr.rel (%p308) target = $region28
      $region27: #{tpu_custom_call.1} parent=5 // pred_region
        // Predicated region
        $region29: #{tpu_custom_call.1} parent=27 // pred_check
          %p311 = pneg %p60
        $region30: #{tpu_custom_call.1} parent=27 // pred_check_branch
          %313 = sbr.rel (%p311) target = $region32
        $region31: #{tpu_custom_call.1} parent=27 // pred_region
          %s314 = sand.u32 %s50, 1
          %s315 = scalar_lea.sflag [#allocation4], %s314
          %s316 = sand.u32 %s50, 1
          %s317 = smul.addr %s316, 4
          %s318 = scalar_lea.vmem [#allocation3], %s317
          %s320 = ssub.s32 64, 64
          %321 = vsyncadd %s315, %s320
          %s322 = smul.addr %s35, 64
          %s323 = scalar_lea.hbm %s0, %s322
          %s325 = sshll.u32 %s318, 4
          %s326 = int_to_ptr.vmem [resolvable:$true] %s325
          %328 = dma.hbm_to_vmem [thread:$0]  %s323, 64, %s326, %s315
        $region32: #{tpu_custom_call.1} parent=27 // pred_fallthru
          _
        // Predicated region
        $region33: #{tpu_custom_call.1} parent=27 // pred_check
          %p329 = pneg %p86
        $region34: #{tpu_custom_call.1} parent=27 // pred_check_branch
          %331 = sbr.rel (%p329) target = $region36
        $region35: #{tpu_custom_call.1} parent=27 // pred_region
          %s332 = sand.u32 %s28, 1
          %s333 = scalar_lea.sflag [#allocation7], %s332
          %s334 = sand.u32 %s76, 1
          %s335 = scalar_lea.vmem [#allocation6], %s334
          %s337 = ssub.s32 16, 16
          %338 = vsyncadd %s333, %s337
          %s339 = smul.addr %s35, 16
          %s340 = scalar_lea.hbm %s1, %s339
          %s342 = sshll.u32 %s335, 4
          %s343 = int_to_ptr.vmem [resolvable:$true] %s342
          %345 = dma.hbm_to_vmem [thread:$0]  %s340, 16, %s343, %s333
        $region36: #{tpu_custom_call.1} parent=27 // pred_fallthru
          _
        // Predicated region
        $region37: #{tpu_custom_call.1} parent=27 // pred_check
          %p346 = pneg %p112
        $region38: #{tpu_custom_call.1} parent=27 // pred_check_branch
          %348 = sbr.rel (%p346) target = $region40
        $region39: #{tpu_custom_call.1} parent=27 // pred_region
          %s349 = sand.u32 %s28, 1
          %s350 = scalar_lea.sflag [#allocation7], %s349
          %s351 = sand.u32 %s102, 1
          %s352 = smul.addr %s351, 16
          %s353 = scalar_lea.vmem [#allocation8], %s352
          %s355 = ssub.s32 256, 256
          %356 = vsyncadd %s350, %s355
          %s357 = smul.addr %s36, 4
          %s358 = smul.addr %s357, 64
          %s359 = scalar_lea.hbm %s2, %s358
          %s360 = sshll.u32 %s353, 4
          %s361 = int_to_ptr.vmem [resolvable:$true] %s360
          %366 = dma.hbm_to_vmem [thread:$0]  %s359, 256, %s361, %s350, 64, 64, 4
        $region40: #{tpu_custom_call.1} parent=27 // pred_fallthru
          _
        // Predicated region
        $region41: #{tpu_custom_call.1} parent=27 // pred_check
          %p367 = pneg %p138
        $region42: #{tpu_custom_call.1} parent=27 // pred_check_branch
          %369 = sbr.rel (%p367) target = $region44
        $region43: #{tpu_custom_call.1} parent=27 // pred_region
          %s370 = sand.u32 %s28, 1
          %s371 = scalar_lea.sflag [#allocation10], %s370
          %s372 = sand.u32 %s128, 1
          %s373 = scalar_lea.vmem [#allocation9], %s372
          %s375 = ssub.s32 16, 16
          %376 = vsyncadd %s371, %s375
          %s377 = smul.addr %s36, 16
          %s378 = scalar_lea.hbm %s3, %s377
          %s380 = sshll.u32 %s373, 4
          %s381 = int_to_ptr.vmem [resolvable:$true] %s380
          %383 = dma.hbm_to_vmem [thread:$0]  %s378, 16, %s381, %s371
        $region44: #{tpu_custom_call.1} parent=27 // pred_fallthru
          _
        // Predicated region
        $region45: #{tpu_custom_call.1} parent=27 // pred_check
          %p384 = pneg %p164
        $region46: #{tpu_custom_call.1} parent=27 // pred_check_branch
          %386 = sbr.rel (%p384) target = $region48
        $region47: #{tpu_custom_call.1} parent=27 // pred_region
          %s387 = sand.u32 %s28, 1
          %s388 = scalar_lea.sflag [#allocation10], %s387
          %s389 = sand.u32 %s154, 1
          %s390 = smul.addr %s389, 4
          %s391 = scalar_lea.vmem [#allocation11], %s390
          %s393 = ssub.s32 64, 64
          %394 = vsyncadd %s388, %s393
          %s395 = smul.addr %s36, 64
          %s396 = scalar_lea.hbm %s4, %s395
          %s398 = sshll.u32 %s391, 4
          %s399 = int_to_ptr.vmem [resolvable:$true] %s398
          %401 = dma.hbm_to_vmem [thread:$0]  %s396, 64, %s399, %s388
        $region48: #{tpu_custom_call.1} parent=27 // pred_fallthru
          _
      $region28: #{tpu_custom_call.1} parent=5 // pred_fallthru
        _
      %p402 = scmp.le.s32.totalorder 1, %s28
      %p403 = scmp.lt.s32.totalorder %s28, 9
      %p404 = pnand %p402, %p403
      %p405 = pneg %p404
      // Predicated region
      $region49: #{tpu_custom_call.1} parent=5 // pred_check
        _
      $region50: #{tpu_custom_call.1} parent=5 // pred_check_branch
        %407 = sbr.rel (%p404) target = $region52
      $region51: #{tpu_custom_call.1} parent=5 // pred_region
        %s408 = ssub.s32 %s28, 1
        %s409 = sand.u32 %s53, 1
        %s410 = scalar_lea.sflag [#allocation4], %s409
        %s411 = sand.u32 %s53, 1
        %s412 = smul.addr %s411, 4
        %s413 = scalar_lea.vmem [#allocation3], %s412
        // Predicated region
        $region53: #{tpu_custom_call.1} parent=51 // pred_check
          %p414 = pneg %p66
        $region54: #{tpu_custom_call.1} parent=51 // pred_check_branch
          %416 = sbr.rel (%p414) target = $region56
        $region55: #{tpu_custom_call.1} parent=51 // pred_region
          %417 = dma.done %s410, 64
        $region56: #{tpu_custom_call.1} parent=51 // pred_fallthru
          _
        %s418 = sand.u32 %s33, 1
        %s419 = scalar_lea.sflag [#allocation7], %s418
        %s420 = sand.u32 %s79, 1
        %s421 = scalar_lea.vmem [#allocation6], %s420
        // Predicated region
        $region57: #{tpu_custom_call.1} parent=51 // pred_check
          %p422 = pneg %p92
        $region58: #{tpu_custom_call.1} parent=51 // pred_check_branch
          %424 = sbr.rel (%p422) target = $region60
        $region59: #{tpu_custom_call.1} parent=51 // pred_region
          %425 = dma.done %s419, 16
        $region60: #{tpu_custom_call.1} parent=51 // pred_fallthru
          _
        %s426 = sand.u32 %s33, 1
        %s427 = scalar_lea.sflag [#allocation7], %s426
        %s428 = sand.u32 %s105, 1
        %s429 = smul.addr %s428, 16
        %s430 = scalar_lea.vmem [#allocation8], %s429
        // Predicated region
        $region61: #{tpu_custom_call.1} parent=51 // pred_check
          %p431 = pneg %p118
        $region62: #{tpu_custom_call.1} parent=51 // pred_check_branch
          %433 = sbr.rel (%p431) target = $region64
        $region63: #{tpu_custom_call.1} parent=51 // pred_region
          %434 = dma.done %s427, 256
        $region64: #{tpu_custom_call.1} parent=51 // pred_fallthru
          _
        %s435 = sand.u32 %s33, 1
        %s436 = scalar_lea.sflag [#allocation10], %s435
        %s437 = sand.u32 %s131, 1
        %s438 = scalar_lea.vmem [#allocation9], %s437
        // Predicated region
        $region65: #{tpu_custom_call.1} parent=51 // pred_check
          %p439 = pneg %p144
        $region66: #{tpu_custom_call.1} parent=51 // pred_check_branch
          %441 = sbr.rel (%p439) target = $region68
        $region67: #{tpu_custom_call.1} parent=51 // pred_region
          %442 = dma.done %s436, 16
        $region68: #{tpu_custom_call.1} parent=51 // pred_fallthru
          _
        %s443 = sand.u32 %s33, 1
        %s444 = scalar_lea.sflag [#allocation10], %s443
        %s445 = sand.u32 %s157, 1
        %s446 = smul.addr %s445, 4
        %s447 = scalar_lea.vmem [#allocation11], %s446
        // Predicated region
        $region69: #{tpu_custom_call.1} parent=51 // pred_check
          %p448 = pneg %p170
        $region70: #{tpu_custom_call.1} parent=51 // pred_check_branch
          %450 = sbr.rel (%p448) target = $region72
        $region71: #{tpu_custom_call.1} parent=51 // pred_region
          %451 = dma.done %s444, 64
        $region72: #{tpu_custom_call.1} parent=51 // pred_fallthru
          _
        // Predicated region
        $region73: #{tpu_custom_call.1} parent=51 // pred_check
          %p452 = pneg %p191
        $region74: #{tpu_custom_call.1} parent=51 // pred_check_branch
          %454 = sbr.rel (%p452) target = $region76
        $region75: #{tpu_custom_call.1} parent=51 // pred_region
          %455 = dma.done [#allocation13], 16
        $region76: #{tpu_custom_call.1} parent=51 // pred_fallthru
          _
        // Predicated region
        $region77: #{tpu_custom_call.1} parent=51 // pred_check
          %p456 = pneg %p212
        $region78: #{tpu_custom_call.1} parent=51 // pred_check_branch
          %458 = sbr.rel (%p456) target = $region80
        $region79: #{tpu_custom_call.1} parent=51 // pred_region
          %459 = dma.done [#allocation13], 16
        $region80: #{tpu_custom_call.1} parent=51 // pred_fallthru
          _
        // Predicated region
        $region81: #{tpu_custom_call.1} parent=51 // pred_check
          %p460 = pneg %p233
        $region82: #{tpu_custom_call.1} parent=51 // pred_check_branch
          %462 = sbr.rel (%p460) target = $region84
        $region83: #{tpu_custom_call.1} parent=51 // pred_region
          %463 = dma.done [#allocation16], 16
        $region84: #{tpu_custom_call.1} parent=51 // pred_fallthru
          _
        %s464 = sand.u32 %s53, 1
        %s465 = scalar_lea.sflag [#allocation4], %s464
        %s466 = sand.u32 %s53, 1
        %s467 = smul.addr %s466, 4
        %s468 = scalar_lea.vmem [#allocation3], %s467
        %p469 = pneg %p66
        %p470 = pneg %p63
        %s471 = sand.u32 %s33, 1
        %s472 = scalar_lea.sflag [#allocation7], %s471
        %s473 = sand.u32 %s79, 1
        %s474 = scalar_lea.vmem [#allocation6], %s473
        %p475 = pneg %p92
        %p476 = pneg %p89
        %s477 = sand.u32 %s33, 1
        %s478 = scalar_lea.sflag [#allocation7], %s477
        %s479 = sand.u32 %s105, 1
        %s480 = smul.addr %s479, 16
        %s481 = scalar_lea.vmem [#allocation8], %s480
        %p482 = pneg %p118
        %p483 = pneg %p115
        %s484 = sand.u32 %s33, 1
        %s485 = scalar_lea.sflag [#allocation10], %s484
        %s486 = sand.u32 %s131, 1
        %s487 = scalar_lea.vmem [#allocation9], %s486
        %p488 = pneg %p144
        %p489 = pneg %p141
        %s490 = sand.u32 %s33, 1
        %s491 = scalar_lea.sflag [#allocation10], %s490
        %s492 = sand.u32 %s157, 1
        %s493 = smul.addr %s492, 4
        %s494 = scalar_lea.vmem [#allocation11], %s493
        %p495 = pneg %p170
        %p496 = pneg %p167
        %p497 = pneg %p191
        %p498 = pneg %p188
        %p499 = pneg %p212
        %p500 = pneg %p209
        %p501 = pneg %p233
        %p502 = pneg %p230
        %p503 = pneg %p259
        %p504 = pneg %p256
        %s505 = sand.u32 %s246, 1
        %s506 = scalar_lea.sflag [#allocation5], %s505
        %s507 = sand.u32 %s246, 1
        %s508 = smul.addr %s507, 4
        %s509 = scalar_lea.vmem [#allocation17], %s508
        %p511 = scmp.eq.s32.totalorder %s38, 0
        // Predicated region
        $region85: #{tpu_custom_call.1} parent=51 // pred_check
          %p512 = pneg %p511
        $region86: #{tpu_custom_call.1} parent=51 // pred_check_branch
          %514 = sbr.rel (%p512) target = $region88
        $region87: #{tpu_custom_call.1} parent=51 // pred_region
          %vm515 = vcmask 261120
          %516 = vst.msk [vmem:[#allocation2] sm:$0xff] %vm515, 0.0
        $region88: #{tpu_custom_call.1} parent=51 // pred_fallthru
          _
        %v517 = vld [vmem:[%s413] sm:$0xf]
        %v518 = vld [vmem:[%s430] sm:$0xf]
        %v519 = vld [vmem:[%s430 + $0x4] sm:$0xf]
        %v520 = vld [vmem:[%s430 + $0x8] sm:$0xf]
        %v521 = vld [vmem:[%s430 + $0xc] sm:$0xf]
        %v522 = vld [vmem:[%s438] sm:$0x1]
        %v524 = vlaneseq
        %v525 = vshrl.u32 %v524, 7
        %v526 = vsub.s32 0, %v525
        %v527 = vrot.slane %v522, %v526
        %v533 = vunpack.c.l.b16 %v518
        %v534 = vunpack.c.l.b16 %v519
        %v535 = vunpack.c.l.b16 %v520
        %v536 = vunpack.c.l.b16 %v521
        %v537 = vpack.c.b16 %v534, %v533
        %v538 = vpack.c.b16 %v536, %v535
        %vm541 = vcmask 261120
        %v543 = vsel %vm541, %v517, 0
        %545 = vmatprep.subr.bf16.mxu0 0
        %546 = vmatpush1.bf16.msra.mxu0 %v537
        %547 = vmatprep.subr.bf16.mxu0 0
        %548 = vmatpush1.bf16.msra.mxu0 %v538
        %549 = vmatprep.subr.bf16.mxu0 0
        %550 = vmatpush1.bf16.msra.mxu0 0
        %551 = vmatprep.subr.bf16.mxu0 0
        %552 = vmatpush1.bf16.msra.mxu0 0
        %553 = vmatprep.subr.bf16.mxu0 0
        %554 = vmatpush1.bf16.msra.mxu0 0
        %555 = vmatprep.subr.bf16.mxu0 0
        %556 = vmatpush1.bf16.msra.mxu0 0
        %557 = vmatprep.subr.bf16.mxu0 0
        %558 = vmatpush1.bf16.msra.mxu0 0
        %559 = vmatprep.subr.bf16.mxu0 0
        %560 = vmatpush1.bf16.msra.mxu0 0
        %561 = vmatprep.subr.bf16.mxu0 0
        %562 = vmatpush1.bf16.msra.mxu0 0
        %563 = vmatprep.subr.bf16.mxu0 0
        %564 = vmatpush1.bf16.msra.mxu0 0
        %565 = vmatprep.subr.bf16.mxu0 0
        %566 = vmatpush1.bf16.msra.mxu0 0
        %567 = vmatprep.subr.bf16.mxu0 0
        %568 = vmatpush1.bf16.msra.mxu0 0
        %569 = vmatprep.subr.bf16.mxu0 0
        %570 = vmatpush1.bf16.msra.mxu0 0
        %571 = vmatprep.subr.bf16.mxu0 0
        %572 = vmatpush1.bf16.msra.mxu0 0
        %573 = vmatprep.subr.bf16.mxu0 0
        %574 = vmatpush1.bf16.msra.mxu0 0
        %575 = vmatprep.subr.bf16.mxu0 0
        %576 = vmatpush1.bf16.msra.mxu0 0
        %577 = vmatprep.mubr.bf16.mxu0 0
        %578 = vmatmul.mubr.bf16.gmra.mrb[0].mxu0 %v543
        %v579 = vpop.f32.mrb[0].mxu0
        %v580 = vadd.f32 %v527, %v579
        %v581 = vpop.f32.mrb[0].mxu0
        %v582 = vpop.f32.mrb[0].mxu0
        %v583 = vpop.f32.mrb[0].mxu0
        %584 = vdwg.mxu0
        %v585 = vpack.c.bf16 %v580, %v580
        %v586 = vld [vmem:[%s421] sm:$0x1]
        %v588 = vlaneseq
        %v589 = vshrl.u32 %v588, 7
        %v590 = vsub.s32 0, %v589
        %v591 = vrot.slane %v586, %v590
        %594 = vrot.lane.b32.xlu0 %v585, 120
        %v595 = vpop.permute.xlu0 %594
        %vm596 = vcmask 64512
        %v598 = vsel %vm596, %v585, 0
        %v601 = vsel %vm596, %v595, 0
        %603 = vmatprep.subr.bf16.mxu0 0
        %604 = vmatpush1.bf16.xpose.msra.mxu0 %v601
        %605 = vmatprep.subr.bf16.mxu0 0
        %606 = vmatpush1.bf16.xpose.msra.mxu0 0
        %607 = vmatprep.subr.bf16.mxu0 0
        %608 = vmatpush1.bf16.xpose.msra.mxu0 0
        %609 = vmatprep.subr.bf16.mxu0 0
        %610 = vmatpush1.bf16.xpose.msra.mxu0 0
        %611 = vmatprep.subr.bf16.mxu0 0
        %612 = vmatpush1.bf16.xpose.msra.mxu0 0
        %613 = vmatprep.subr.bf16.mxu0 0
        %614 = vmatpush1.bf16.xpose.msra.mxu0 0
        %615 = vmatprep.subr.bf16.mxu0 0
        %616 = vmatpush1.bf16.xpose.msra.mxu0 0
        %617 = vmatprep.subr.bf16.mxu0 0
        %618 = vmatpush1.bf16.xpose.msra.mxu0 0
        %619 = vmatprep.subr.bf16.mxu0 0
        %620 = vmatpush1.bf16.xpose.msra.mxu0 0
        %621 = vmatprep.subr.bf16.mxu0 0
        %622 = vmatpush1.bf16.xpose.msra.mxu0 0
        %623 = vmatprep.subr.bf16.mxu0 0
        %624 = vmatpush1.bf16.xpose.msra.mxu0 0
        %625 = vmatprep.subr.bf16.mxu0 0
        %626 = vmatpush1.bf16.xpose.msra.mxu0 0
        %627 = vmatprep.subr.bf16.mxu0 0
        %628 = vmatpush1.bf16.xpose.msra.mxu0 0
        %629 = vmatprep.subr.bf16.mxu0 0
        %630 = vmatpush1.bf16.xpose.msra.mxu0 0
        %631 = vmatprep.subr.bf16.mxu0 0
        %632 = vmatpush1.bf16.xpose.msra.mxu0 0
        %633 = vmatprep.subr.bf16.mxu0 0
        %634 = vmatpush1.bf16.xpose.msra.mxu0 0
        %635 = vmatprep.mubr.bf16.mxu0 0
        %636 = vmatmul.mubr.bf16.gmra.mrb[0].mxu0 %v598
        %v637 = vpop.f32.mrb[0].mxu0
        %v638 = vadd.f32 %v591, %v637
        %v639 = vpop.f32.mrb[0].mxu0
        %v640 = vpop.f32.mrb[0].mxu0
        %v641 = vpop.f32.mrb[0].mxu0
        %642 = vdwg.mxu0
        %v643 = vsel %vm596, %v638, -inf
        %644 = vmax.xlane.f32.xlu0 %v643
        %v645 = vpop.xlane.xlu0 %644
        %v646 = vsub.f32 %v638, %v645
        %v647 = vmul.f32 %v646, 1.442695
        %v648 = vpow.pop %v647
        %v649 = vsel %vm596, %v648, 0.0
        %650 = vadd.xlane.f32.xlu0 %v649
        %v651 = vpop.xlane.xlu0 %650
        %v652 = vrcp.pop %v651
        %v653 = vmul.f32 %v648, %v652
        %v654 = vpack.c.bf16 %v653, %v653
        %655 = vrot.lane.b32.xlu0 %v585, 112
        %v656 = vpop.permute.xlu0 %655
        %v658 = vsel %vm596, %v654, 0
        %vm660 = vcmask 1043456
        %v662 = vsel %vm660, %v656, 0
        %664 = vmatprep.subr.bf16.mxu0 0
        %665 = vmatpush1.bf16.msra.mxu0 %v662
        %666 = vmatprep.subr.bf16.mxu0 0
        %667 = vmatpush1.bf16.msra.mxu0 0
        %668 = vmatprep.subr.bf16.mxu0 0
        %669 = vmatpush1.bf16.msra.mxu0 0
        %670 = vmatprep.subr.bf16.mxu0 0
        %671 = vmatpush1.bf16.msra.mxu0 0
        %672 = vmatprep.subr.bf16.mxu0 0
        %673 = vmatpush1.bf16.msra.mxu0 0
        %674 = vmatprep.subr.bf16.mxu0 0
        %675 = vmatpush1.bf16.msra.mxu0 0
        %676 = vmatprep.subr.bf16.mxu0 0
        %677 = vmatpush1.bf16.msra.mxu0 0
        %678 = vmatprep.subr.bf16.mxu0 0
        %679 = vmatpush1.bf16.msra.mxu0 0
        %680 = vmatprep.subr.bf16.mxu0 0
        %681 = vmatpush1.bf16.msra.mxu0 0
        %682 = vmatprep.subr.bf16.mxu0 0
        %683 = vmatpush1.bf16.msra.mxu0 0
        %684 = vmatprep.subr.bf16.mxu0 0
        %685 = vmatpush1.bf16.msra.mxu0 0
        %686 = vmatprep.subr.bf16.mxu0 0
        %687 = vmatpush1.bf16.msra.mxu0 0
        %688 = vmatprep.subr.bf16.mxu0 0
        %689 = vmatpush1.bf16.msra.mxu0 0
        %690 = vmatprep.subr.bf16.mxu0 0
        %691 = vmatpush1.bf16.msra.mxu0 0
        %692 = vmatprep.subr.bf16.mxu0 0
        %693 = vmatpush1.bf16.msra.mxu0 0
        %694 = vmatprep.subr.bf16.mxu0 0
        %695 = vmatpush1.bf16.msra.mxu0 0
        %696 = vmatprep.mubr.bf16.mxu0 0
        %697 = vmatmul.mubr.bf16.gmra.mrb[0].mxu0 %v658
        %v698 = vpop.f32.mrb[0].mxu0
        %v699 = vadd.f32 0.0, %v698
        %v700 = vpop.f32.mrb[0].mxu0
        %v701 = vpop.f32.mrb[0].mxu0
        %v702 = vpop.f32.mrb[0].mxu0
        %703 = vdwg.mxu0
        %v704 = vld [vmem:[#allocation2] sm:$0xff]
        %v705 = vpack.c.bf16 %v699, %v699
        %v706 = vld [vmem:[%s447] sm:$0xf]
        %v708 = vsel %vm596, %v705, 0
        %v711 = vsel %vm660, %v706, 0
        %713 = vmatprep.subr.bf16.mxu0 0
        %714 = vmatpush1.bf16.msra.mxu0 %v711
        %715 = vmatprep.subr.bf16.mxu0 0
        %716 = vmatpush1.bf16.msra.mxu0 0
        %717 = vmatprep.subr.bf16.mxu0 0
        %718 = vmatpush1.bf16.msra.mxu0 0
        %719 = vmatprep.subr.bf16.mxu0 0
        %720 = vmatpush1.bf16.msra.mxu0 0
        %721 = vmatprep.subr.bf16.mxu0 0
        %722 = vmatpush1.bf16.msra.mxu0 0
        %723 = vmatprep.subr.bf16.mxu0 0
        %724 = vmatpush1.bf16.msra.mxu0 0
        %725 = vmatprep.subr.bf16.mxu0 0
        %726 = vmatpush1.bf16.msra.mxu0 0
        %727 = vmatprep.subr.bf16.mxu0 0
        %728 = vmatpush1.bf16.msra.mxu0 0
        %729 = vmatprep.subr.bf16.mxu0 0
        %730 = vmatpush1.bf16.msra.mxu0 0
        %731 = vmatprep.subr.bf16.mxu0 0
        %732 = vmatpush1.bf16.msra.mxu0 0
        %733 = vmatprep.subr.bf16.mxu0 0
        %734 = vmatpush1.bf16.msra.mxu0 0
        %735 = vmatprep.subr.bf16.mxu0 0
        %736 = vmatpush1.bf16.msra.mxu0 0
        %737 = vmatprep.subr.bf16.mxu0 0
        %738 = vmatpush1.bf16.msra.mxu0 0
        %739 = vmatprep.subr.bf16.mxu0 0
        %740 = vmatpush1.bf16.msra.mxu0 0
        %741 = vmatprep.subr.bf16.mxu0 0
        %742 = vmatpush1.bf16.msra.mxu0 0
        %743 = vmatprep.subr.bf16.mxu0 0
        %744 = vmatpush1.bf16.msra.mxu0 0
        %745 = vmatprep.mubr.bf16.mxu0 0
        %746 = vmatmul.mubr.bf16.gmra.mrb[0].mxu0 %v708
        %v747 = vpop.f32.mrb[0].mxu0
        %v748 = vadd.f32 0.0, %v747
        %v749 = vpop.f32.mrb[0].mxu0
        %v750 = vpop.f32.mrb[0].mxu0
        %v751 = vpop.f32.mrb[0].mxu0
        %752 = vdwg.mxu0
        %v753 = vadd.f32 %v704, %v748
        %754 = vst.msk [vmem:[#allocation2] sm:$0xff] %vm541, %v753
        %p755 = scmp.eq.s32.totalorder %s38, 3
        // Predicated region
        $region89: #{tpu_custom_call.1} parent=51 // pred_check
          %p756 = pneg %p755
        $region90: #{tpu_custom_call.1} parent=51 // pred_check_branch
          %758 = sbr.rel (%p756) target = $region92
        $region91: #{tpu_custom_call.1} parent=51 // pred_region
          %v759 = vld [vmem:[#allocation2] sm:$0xff]
          %v760 = vld [vmem:[#allocation12] sm:$0x1]
          %v762 = vlaneseq
          %v763 = vshrl.u32 %v762, 7
          %v764 = vsub.s32 0, %v763
          %v765 = vrot.slane %v760, %v764
          %v767 = vadd.f32 %v759, %v765
          %v768 = vld [vmem:[%s413] sm:$0xf]
          %v769 = vunpack.c.l.bf16 %v768
          %v770 = vadd.f32 %v767, %v769
          %v771 = vsel %vm541, %v770, 0.0
          %772 = vadd.xlane.f32.xlu0 %v771
          %v773 = vpop.xlane.xlu0 %772
          %v774 = vrcp.pop 32.0
          %v775 = vmul.f32 %v773, %v774
          %v776 = vsub.f32 %v770, %v775
          %v777 = vmul.f32 %v776, %v776
          %v778 = vsel %vm541, %v777, 0.0
          %779 = vadd.xlane.f32.xlu0 %v778
          %v780 = vpop.xlane.xlu0 %779
          %v781 = vmul.f32 %v780, %v774
          %v782 = vadd.f32 %v781, 1e-12
          %v783 = vrsqrt.pop %v782
          %v784 = vmul.f32 %v776, %v783
          %v785 = vld [vmem:[#allocation14] sm:$0x1]
          %v787 = vlaneseq
          %v788 = vshrl.u32 %v787, 7
          %v789 = vsub.s32 0, %v788
          %v790 = vrot.slane %v785, %v789
          %v792 = vmul.f32 %v784, %v790
          %v793 = vld [vmem:[#allocation15] sm:$0x1]
          %v795 = vlaneseq
          %v796 = vshrl.u32 %v795, 7
          %v797 = vsub.s32 0, %v796
          %v798 = vrot.slane %v793, %v797
          %v800 = vadd.f32 %v792, %v798
          %v801 = vpack.c.bf16 %v800, %v800
          %vm802 = vcmask 257024
          %803 = vst.msk [vmem:[%s509] sm:$0xf] %vm802, %v801
        $region92: #{tpu_custom_call.1} parent=51 // pred_fallthru
          _
        %s804 = sand.u32 %s246, 1
        %s805 = scalar_lea.sflag [#allocation5], %s804
        %s806 = sand.u32 %s246, 1
        %s807 = smul.addr %s806, 4
        %s808 = scalar_lea.vmem [#allocation17], %s807
        // Predicated region
        $region93: #{tpu_custom_call.1} parent=51 // pred_check
          %p809 = pneg %p256
        $region94: #{tpu_custom_call.1} parent=51 // pred_check_branch
          %811 = sbr.rel (%p809) target = $region96
        $region95: #{tpu_custom_call.1} parent=51 // pred_region
          %s813 = ssub.s32 64, 64
          %814 = vsyncadd %s805, %s813
          %s815 = smul.addr %s37, 64
          %s816 = scalar_lea.hbm %s8, %s815
          %s818 = sshll.u32 %s808, 4
          %s819 = int_to_ptr.vmem [resolvable:$true] %s818
          %821 = dma.vmem_to_hbm [thread:$0]  %s819, 64, %s816, %s805
        $region96: #{tpu_custom_call.1} parent=51 // pred_fallthru
          _
      $region52: #{tpu_custom_call.1} parent=5 // pred_fallthru
        _
      %p822 = scmp.le.s32.totalorder 2, %s28
      // Predicated region
      $region97: #{tpu_custom_call.1} parent=5 // pred_check
        %p823 = pneg %p822
      $region98: #{tpu_custom_call.1} parent=5 // pred_check_branch
        %825 = sbr.rel (%p823) target = $region100
      $region99: #{tpu_custom_call.1} parent=5 // pred_region
        %s826 = ssub.s32 %s28, 2
        // Predicated region
        $region101: #{tpu_custom_call.1} parent=99 // pred_check
          %p827 = pneg %p262
        $region102: #{tpu_custom_call.1} parent=99 // pred_check_branch
          %829 = sbr.rel (%p827) target = $region104
        $region103: #{tpu_custom_call.1} parent=99 // pred_region
          %s830 = sand.u32 %s247, 1
          %s831 = scalar_lea.sflag [#allocation5], %s830
          %s832 = sand.u32 %s247, 1
          %s833 = smul.addr %s832, 4
          %s834 = scalar_lea.vmem [#allocation17], %s833
          %835 = dma.done %s831, 64
        $region104: #{tpu_custom_call.1} parent=99 // pred_fallthru
          _
      $region100: #{tpu_custom_call.1} parent=5 // pred_fallthru
        _
    $region6: #{tpu_custom_call.1} parent=1 // loop_footer
      %s32 = sadd.s32 1, %s28
    $region7: #{tpu_custom_call.1} parent=1 // loop_footer_branch
      %27 = sbr.rel target = $region3
    $region8: #{tpu_custom_call.1} parent=1 // loop_exit
      _
    %836 = vsyncpa [#allocation4], 1
    %s837 = scalar_lea.sflag [#allocation4], 1
    %838 = vsyncpa %s837, 1
    %839 = vsyncpa [#allocation7], 1
    %s840 = scalar_lea.sflag [#allocation7], 1
    %841 = vsyncpa %s840, 1
    %842 = vsyncpa [#allocation10], 1
    %s843 = scalar_lea.sflag [#allocation10], 1
    %844 = vsyncpa %s843, 1
    %845 = vsyncpa [#allocation13], 1
    %846 = vsyncpa [#allocation16], 1
    %847 = vsyncpa [#allocation5], 1
    %s848 = scalar_lea.sflag [#allocation5], 1
    %849 = vsyncpa %s848, 1

</llo_original>
